<compile_context>
chip_gen: v7x
topology: tpu7x:2x2x1
jax: 0.10.0
libtpu: 0.0.40
codegen_flags: <defaults>
</compile_context>

<pallas_src>
import jax
import jax.numpy as jnp
from jax.experimental import pallas as pl
from jax.experimental.pallas import tpu as pltpu

_LANE = 128        # TPU lane width: keep the last dim a full, unmasked 128 lanes.
_TB_ROWS = 1024    # rows per block: 1024 * 128 * 4B = 512 KiB / buffer (f32);
                   # with double-buffered in+out this is ~2 MiB of VMEM — safe on
                   # v5e (16 MiB scoped), v6e (32 MiB) and v7x (64 MiB physical).


def _identity_encode_kernel(x_ref, o_ref):
    # Elementwise identity "encoding" of one lane-dense feature block.
    o_ref[...] = x_ref[...]


@jax.jit
def feature_encoder_forward(binary_feature: jax.Array) -> jax.Array:
    """Pallas implementation of FeatureEncoder.forward (identity base behavior).

    binary_feature: (batch, binary_input_size).  Returns same shape/dtype.
    """
    b, f = binary_feature.shape
    dtype = binary_feature.dtype
    n = b * f
    if n == 0:
        return binary_feature

    # ---- lane-dense re-layout: (B, F) -> (rows, 128) -------------------------
    # F is typically far below 128 (32 in the demo); storing it directly would
    # mask away 3/4 of every vreg/store slot.  Flatten and pad to a multiple of
    # the lane width instead.
    rows = pl.cdiv(n, _LANE)
    padded = rows * _LANE
    flat = binary_feature.reshape(-1)
    if padded != n:
        flat = jnp.pad(flat, (0, padded - n))
    x2d = flat.reshape(rows, _LANE)

    # ---- row tiling ----------------------------------------------------------
    # tb == rows (full dim) for small inputs, otherwise a multiple of 8.
    tb = rows if rows <= _TB_ROWS else _TB_ROWS
    num_blocks = pl.cdiv(rows, tb)

    out_shape = jax.ShapeDtypeStruct((rows, _LANE), dtype)

    if num_blocks == 1:
        # Small input: single block, no grid (avoid a pointless 1-trip loop),
        # explicit VMEM residency.  (A caller could skip the kernel launch
        # entirely for sub-vreg inputs; kept here so the kernel path is always
        # exercised and verified.)
        out2d = pl.pallas_call(
            _identity_encode_kernel,
            out_shape=out_shape,
            in_specs=[pl.BlockSpec(memory_space=pltpu.MemorySpace.VMEM)],
            out_specs=pl.BlockSpec(memory_space=pltpu.MemorySpace.VMEM),
            input_output_aliases={0: 0},
        )(x2d)
    else:
        # Large input: batch-tiled, software-pipelined copy.  The row axis is
        # embarrassingly parallel -> "parallel" so v7x's 2 TCs both participate
        # (neutral on single-TC v5e/v6e).
        out2d = pl.pallas_call(
            _identity_encode_kernel,
            out_shape=out_shape,
            grid=(num_blocks,),
            in_specs=[pl.BlockSpec((tb, _LANE), lambda i: (i, 0))],
            out_specs=pl.BlockSpec((tb, _LANE), lambda i: (i, 0)),
            input_output_aliases={0: 0},
            compiler_params=pltpu.CompilerParams(
                dimension_semantics=("parallel",),
            ),
        )(x2d)

    out_flat = out2d.reshape(-1)
    if padded != n:
        out_flat = out_flat[:n]
    return out_flat.reshape(b, f)


class FeatureEncoder:
    """JAX/Pallas mirror of the PyTorch FeatureEncoder base class."""

    def __init__(self, binary_input_size, *args):
        self.binary_input_size = binary_input_size
        # No parameters: the PyTorch __init__ registers none.

    def __call__(self, binary_feature: jax.Array) -> jax.Array:
        assert binary_feature.shape[-1] == self.binary_input_size
        return feature_encoder_forward(binary_feature)


if __name__ == "__main__":
    key = jax.random.PRNGKey(0)

    # Small shape consistent with the module interface.
    batch = 2
    binary_input_size = 32
    bits = jax.random.bernoulli(key, p=0.5, shape=(batch, binary_input_size))
    binary_feature = bits.astype(jnp.float32)

    encoder = FeatureEncoder(binary_input_size)
    out = jax.block_until_ready(encoder(binary_feature))

    assert out.shape == (batch, binary_input_size)
    assert out.dtype == jnp.float32
    assert bool(jnp.all(out == binary_feature))

    # Also exercise the multi-block tiled path (2048*80 elems -> 1280 rows ->
    # two 1024-row blocks, last one partial) to cover masking + pipelining.
    big = jax.random.normal(key, (2048, 80), dtype=jnp.float32)
    big_out = jax.block_until_ready(FeatureEncoder(80)(big))
    assert big_out.shape == big.shape
    assert bool(jnp.all(big_out == big))

    print("KERNEL_OK")
</pallas_src>

<mosaic_0001>
module attributes {stable_mosaic.version = 11 : i64} {
  func.func @_identity_encode_kernel(%arg0: memref<1x128xf32, #tpu.memory_space<vmem>>, %arg1: memref<1x128xf32, #tpu.memory_space<vmem>>) attributes {dimension_semantics = [], scalar_prefetch = 0 : i64, scratch_operands = 0 : i64, tpu.core_type = #tpu.core_type<tc>} {
    %c0 = arith.constant 0 : index
    %c0_0 = arith.constant 0 : index
    %0 = vector.load %arg0[%c0, %c0_0] : memref<1x128xf32, #tpu.memory_space<vmem>>, vector<1x128xf32>
    %c0_1 = arith.constant 0 : index
    %c0_2 = arith.constant 0 : index
    %1 = vector.load %arg1[%c0_1, %c0_2] : memref<1x128xf32, #tpu.memory_space<vmem>>, vector<1x128xf32>
    tpu.vector_store %arg1[%c0_1, %c0_2], %0 {strides = array<i32>} : memref<1x128xf32, #tpu.memory_space<vmem>>, vector<1x128xf32>,
    return
  }
}

</mosaic_0001>

<llo_original>
// kernel: feature_encoder_forward.1
$region0: #{feature_encoder_forward.1}
  #allocation0 [shape = 'u32[]', space=smem, size = 0x4, offset = 0x4, fixed_abs, tag = 'smem constant byte address 0x4 - core index']
  #allocation1 [shape = 'u32[144,128]{1,0:T(1,128)}', space=vmem, size = 0x12000, scoped, tag = 'internal scratch']
  %s0 = inlined_call_operand.vmem [shape: f32[1,128], index: 0, kind: input, shape index: {}, may-alias: {0,1}]
  %s1 = inlined_call_operand.vmem [shape: f32[1,128], index: 1, kind: output, shape index: {}, may-alias: {0,1}]
  %s2 = sld [smem:[#allocation0]]
  $region14: #{feature_encoder_forward.1} parent=0
    _
  %s4 = ssub.s32 1, %s2
  %s5 = scalar_select 0, %s4, %s2
  // Predicated region
  $region2: #{feature_encoder_forward.1} parent=0 // pred_check
    _
  $region3: #{feature_encoder_forward.1} parent=0 // pred_check_branch
    %7 = sbr.rel (0) target = $region5
  $region4: #{feature_encoder_forward.1} parent=0 // pred_region
    _
  $region5: #{feature_encoder_forward.1} parent=0 // pred_fallthru
    _
  %v8 = vld [vmem:[%s0] sm:$0x1]
  %9 = vst [vmem:[%s1] sm:$0x1] %v8
  // Predicated region
  $region6: #{feature_encoder_forward.1} parent=0 // pred_check
    _
  $region7: #{feature_encoder_forward.1} parent=0 // pred_check_branch
    %11 = sbr.rel (0) target = $region9
  $region8: #{feature_encoder_forward.1} parent=0 // pred_region
    _
  $region9: #{feature_encoder_forward.1} parent=0 // pred_fallthru
    _
  // Predicated region
  $region10: #{feature_encoder_forward.1} parent=0 // pred_check
    _
  $region11: #{feature_encoder_forward.1} parent=0 // pred_check_branch
    %13 = sbr.rel (0) target = $region13
  $region12: #{feature_encoder_forward.1} parent=0 // pred_region
    _
  $region13: #{feature_encoder_forward.1} parent=0 // pred_fallthru
    _

</llo_original>
